<compile_context>
chip_gen: v6e
topology: v6e:2x2x1
jax: 0.10.0
libtpu: 0.0.40
codegen_flags: <defaults>
</compile_context>

<pallas_src>
import functools

import jax
import jax.numpy as jnp
from jax.experimental import pallas as pl
from jax.experimental.pallas import tpu as pltpu


def _kroll(a, shift, axis):
    """Cyclic roll with torch.roll semantics via the XLU rotate unit."""
    n = a.shape[axis]
    shift = shift % n
    if shift == 0:
        return a
    return pltpu.roll(a, shift, axis)


def _ns_frame_kernel(x_cur_ref, x_prev_ref, mask_ref, std_ref, out_ref, *,
                     rho, mu, dt, dx, dy, tiled):
    """One grid step: masked interior sum of r0 + r1 + r2 for one frame pair."""
    std = std_ref[0]

    # ---- trace-time constants (Python floats, folded at trace time) ----------
    inv_dt = 1.0 / dt
    inv_2dx = 1.0 / (2.0 * dx)
    inv_2dy = 1.0 / (2.0 * dy)
    inv_rho = 1.0 / rho
    mu_dx = mu / dx                 # mu * d2udx2 coefficient (buggy /dx kept)
    mu_dy = mu / dy
    c_lvx = 2.0 * mu / dx           # mu*d2vdx2 == c_lvx*(v_hp - v) (exact rewrite)
    c_lvy = 2.0 * mu / dy           # mu*d2vdy2 == c_lvy*(v_wp - v)

    # ---- scalar-unit coefficients absorbing std (once per grid step) ---------
    c_t = std * (inv_rho * inv_dt)  # (1/rho)*d./dt applied to RAW frame diff
    c_px = std * inv_2dx            # dpdx from RAW p rolls
    c_py = std * inv_2dy            # dpdy from RAW p rolls

    # ---- loads: native dtype DMA, upcast to f32 right after load -------------
    ur = x_cur_ref[0, 0, :, :].astype(jnp.float32)
    vr = x_cur_ref[0, 1, :, :].astype(jnp.float32)
    pr = x_cur_ref[0, 2, :, :].astype(jnp.float32)
    ur_prev = x_prev_ref[0, 0, :, :].astype(jnp.float32)
    vr_prev = x_prev_ref[0, 1, :, :].astype(jnp.float32)

    # Time-derivative terms on RAW fields; std lives in c_t.
    dut = ur - ur_prev
    dvt = vr - vr_prev

    # Only u, v need a full-plane std multiply (convective terms use them).
    u = ur * std
    v = vr * std

    H, W = u.shape

    # 11 unique XLU rolls, each computed once.
    # torch dims=1 -> H (axis 0 here), torch dims=2 -> W (axis 1 here).
    u_hm = _kroll(u, -1, 0)
    u_hp = _kroll(u, 1, 0)
    u_wm = _kroll(u, -1, 1)
    u_wp = _kroll(u, 1, 1)
    v_hm = _kroll(v, -1, 0)
    v_hp = _kroll(v, 1, 0)
    v_wm = _kroll(v, -1, 1)
    v_wp = _kroll(v, 1, 1)
    p_hm = _kroll(pr, -1, 0)
    p_hp = _kroll(pr, 1, 0)
    p_wp = _kroll(pr, 1, 1)

    dudx = (u_hm - u_hp) * inv_2dx
    dudy = (u_wm - u_wp) * inv_2dy
    dvdx = (v_hm - v_hp) * inv_2dx
    dvdy = (v_wm - v_wp) * inv_2dy
    dpdx = (p_hm - p_hp) * c_px
    dpdy = (p_hm - p_wp) * c_py                     # (mixed roll dims in ref; kept)

    # mu * (d2udx2 + d2udy2): buggy /dx (not dx**2) and -2*v in the y term, kept.
    lap_u = (u_hm - 2.0 * u + u_hp) * mu_dx + (u_wm - 2.0 * v + u_wp) * mu_dy
    # mu * (d2vdx2 + d2vdy2): buggy duplicated +1 rolls, rewritten exactly.
    lap_v = (v_hp - v) * c_lvx + (v_wp - v) * c_lvy

    r0 = jnp.abs(dudx + dvdy)
    r1 = jnp.abs(c_t * dut + u * dudx + v * dudy + dpdx - lap_u)
    r2 = jnp.abs(c_t * dvt + u * dvdx + v * dvdy + dpdy - lap_v)

    # Resident interior mask (one multiply) replaces the 1:-1 crops.
    r = (r0 + r1 + r2) * mask_ref[...]

    if tiled:
        # Pure-VALU (8, 128) partial accumulation on vreg-aligned slices; no
        # cross-lane reduce and no scalar->vector broadcast.
        acc = r[0:8, :]
        for ti in range(1, H // 8):
            acc = acc + r[ti * 8:(ti + 1) * 8, :]
        tile = acc[:, 0:128]
        for tj in range(1, W // 128):
            tile = tile + acc[:, tj * 128:(tj + 1) * 128]
        out_ref[0] = tile
    else:
        # Fallback for H % 8 != 0 or W % 128 != 0: scalar reduce, replicated.
        out_ref[...] = jnp.full(out_ref.shape, jnp.sum(r), dtype=out_ref.dtype)


def navier_stokes_informed_loss(x, std, *, rho=1.0, mu=1e-05,
                                dt=1.0 / 32, dx=1.0 / 255, dy=1.0 / 255):
    """Pallas TPU implementation of Navier_Stokes_informed_loss.forward(x, _, std)."""
    B, C, H, W = x.shape
    if C != 3:
        raise ValueError("expected 3 channels (u, v, p)")
    if B < 2:
        # The reference crops frame 0 and would average an empty tensor.
        raise ValueError("need at least 2 frames (batch entries)")
    if H < 3 or W < 3:
        raise ValueError("need H >= 3 and W >= 3 (interior crop would be empty)")

    tiled = (H % 8 == 0) and (W % 128 == 0)

    std_arr = jnp.reshape(jnp.asarray(std, jnp.float32), (1,))

    # Interior mask, computed once outside the kernel; its BlockSpec index is
    # constant so Pallas keeps it resident in VMEM for the whole grid.
    row_ok = (jnp.arange(H) >= 1) & (jnp.arange(H) <= H - 2)
    col_ok = (jnp.arange(W) >= 1) & (jnp.arange(W) <= W - 2)
    mask = (row_ok[:, None] & col_ok[None, :]).astype(jnp.float32)

    kernel = functools.partial(_ns_frame_kernel, rho=float(rho), mu=float(mu),
                               dt=float(dt), dx=float(dx), dy=float(dy),
                               tiled=tiled)

    partials = pl.pallas_call(
        kernel,
        out_shape=jax.ShapeDtypeStruct((B - 1, 8, 128), jnp.float32),
        grid=(B - 1,),
        in_specs=[
            # Frame b+1: all of u, v, p (native dtype block).
            pl.BlockSpec((1, 3, H, W), lambda b: (b + 1, 0, 0, 0)),
            # Frame b: only u, v are needed (time derivatives) -> less HBM traffic.
            # NOTE: block size 2 on the channel dim (of 3) is valid only because
            # the index_map always returns channel-block 0 (channels [0, 2)).
            pl.BlockSpec((1, 2, H, W), lambda b: (b, 0, 0, 0)),
            # Interior mask: constant block index => resident, single DMA.
            pl.BlockSpec((H, W), lambda b: (0, 0)),
            # std scalar in SMEM.
            pl.BlockSpec(memory_space=pltpu.SMEM),
        ],
        out_specs=pl.BlockSpec((1, 8, 128), lambda b: (b, 0, 0)),
        compiler_params=pltpu.CompilerParams(
            dimension_semantics=("parallel",),
        ),
    )(x, x, mask, std_arr)
    # TODO(synk): for production-size fields (H*W >> 256*256) add an H-tiling grid
    # axis with one halo row per side and set vmem_limit_bytes; on HBM-bound v5e a
    # scratch-carry of the previous frame (dimension_semantics "arbitrary") cuts
    # the redundant prev-frame u,v reads at the cost of the parallel frame split.

    count = (B - 1) * (H - 2) * (W - 2)
    if tiled:
        total = jnp.sum(partials)
    else:
        total = jnp.sum(partials[:, 0, 0])
    return 0.01 * (total / count) / 3.0


def navier_stokes_informed_loss_ref(x, std, *, rho=1.0, mu=1e-05,
                                    dt=1.0 / 32, dx=1.0 / 255, dy=1.0 / 255):
    """Pure-JAX reference mirroring the PyTorch forward (bugs included)."""
    x = x.astype(jnp.float32) * jnp.asarray(std, jnp.float32)
    u, v, p = x[:, 0], x[:, 1], x[:, 2]
    roll = jnp.roll
    dudt = (u - roll(u, 1, 0)) / dt
    dvdt = (v - roll(v, 1, 0)) / dt
    dudx = (roll(u, -1, 1) - roll(u, 1, 1)) / (2 * dx)
    dudy = (roll(u, -1, 2) - roll(u, 1, 2)) / (2 * dy)
    dvdx = (roll(v, -1, 1) - roll(v, 1, 1)) / (2 * dx)
    dvdy = (roll(v, -1, 2) - roll(v, 1, 2)) / (2 * dy)
    dpdx = (roll(p, -1, 1) - roll(p, 1, 1)) / (2 * dx)
    dpdy = (roll(p, -1, 1) - roll(p, 1, 2)) / (2 * dy)
    d2udx2 = (roll(u, -1, 1) - 2 * u + roll(u, 1, 1)) / dx
    d2udy2 = (roll(u, -1, 2) - 2 * v + roll(u, 1, 2)) / dy
    d2vdx2 = (roll(v, 1, 1) - 2 * v + roll(v, 1, 1)) / dx
    d2vdy2 = (roll(v, 1, 2) - 2 * v + roll(v, 1, 2)) / dy
    crop = lambda a: a[1:, 1:-1, 1:-1]
    u, v, p = crop(u), crop(v), crop(p)
    dudt, dudx, dudy = crop(dudt), crop(dudx), crop(dudy)
    dvdt, dvdx, dvdy = crop(dvdt), crop(dvdx), crop(dvdy)
    dpdx, dpdy = crop(dpdx), crop(dpdy)
    d2udx2, d2udy2, d2vdx2, d2vdy2 = map(crop, (d2udx2, d2udy2, d2vdx2, d2vdy2))
    r0 = jnp.abs(dudx + dvdy)
    r1 = jnp.abs((1.0 / rho) * dudt + u * dudx + v * dudy + dpdx
                 - mu * (d2udx2 + d2udy2))
    r2 = jnp.abs((1.0 / rho) * dvdt + u * dvdx + v * dvdy + dpdy
                 - mu * (d2vdx2 + d2vdy2))
    return 0.01 * (jnp.mean(r0) + jnp.mean(r1) + jnp.mean(r2)) / 3.0


if __name__ == "__main__":
    key = jax.random.PRNGKey(0)
    kx, ks = jax.random.split(key)

    # Small demo shape: lane-dense W (multiple of 128), H a multiple of 8.
    B, C, H, W = 4, 3, 16, 128
    x = jax.random.normal(kx, (B, C, H, W), dtype=jnp.float32)
    std = jnp.abs(jax.random.normal(ks, (), dtype=jnp.float32)) + 0.5

    out = jax.block_until_ready(navier_stokes_informed_loss(x, std))
    ref = navier_stokes_informed_loss_ref(x, std)
    assert jnp.allclose(out, ref, rtol=1e-3, atol=1e-6), (out, ref)

    print("KERNEL_OK")
</pallas_src>

<mosaic_0001>
module attributes {stable_mosaic.version = 11 : i64} {
  func.func @_ns_frame_kernel(%arg0: i32, %arg1: memref<1x3x16x128xf32, #tpu.memory_space<vmem>>, %arg2: memref<1x2x16x128xf32, #tpu.memory_space<vmem>>, %arg3: memref<16x128xf32, #tpu.memory_space<vmem>>, %arg4: memref<1xf32, #tpu.memory_space<smem>>, %arg5: memref<1x8x128xf32, #tpu.memory_space<vmem>>) attributes {dimension_semantics = [#tpu.dimension_semantics<parallel>], iteration_bounds = array<i64: 3>, scalar_prefetch = 0 : i64, scratch_operands = 0 : i64, tpu.core_type = #tpu.core_type<tc>, window_params = [{transform_indices = @transform_0, window_bounds = array<i64: 1, 3, 16, 128>}, {transform_indices = @transform_1, window_bounds = array<i64: 1, 2, 16, 128>}, {pipeline_mode = #tpu.pipeline_mode<synchronous>, transform_indices = @transform_2, window_bounds = array<i64: 16, 128>}, {transform_indices = @transform_3, window_bounds = array<i64: 1>}, {transform_indices = @transform_4, window_bounds = array<i64: 1, 8, 128>}]} {
    %c0 = arith.constant 0 : index
    %0 = memref.load %arg4[%c0] : memref<1xf32, #tpu.memory_space<smem>>
    %cst = arith.constant 3.200000e+01 : f32
    %1 = arith.mulf %0, %cst : f32
    %cst_0 = arith.constant 1.275000e+02 : f32
    %2 = arith.mulf %0, %cst_0 : f32
    %cst_1 = arith.constant 1.275000e+02 : f32
    %3 = arith.mulf %0, %cst_1 : f32
    %c0_2 = arith.constant 0 : index
    %c0_3 = arith.constant 0 : index
    %c0_4 = arith.constant 0 : index
    %c0_5 = arith.constant 0 : index
    %4 = vector.load %arg1[%c0_2, %c0_3, %c0_4, %c0_5] : memref<1x3x16x128xf32, #tpu.memory_space<vmem>>, vector<1x1x16x128xf32>
    %5 = vector.shape_cast %4 : vector<1x1x16x128xf32> to vector<16x128xf32>
    %c0_6 = arith.constant 0 : index
    %c1 = arith.constant 1 : index
    %c0_7 = arith.constant 0 : index
    %c0_8 = arith.constant 0 : index
    %6 = vector.load %arg1[%c0_6, %c1, %c0_7, %c0_8] : memref<1x3x16x128xf32, #tpu.memory_space<vmem>>, vector<1x1x16x128xf32>
    %7 = vector.shape_cast %6 : vector<1x1x16x128xf32> to vector<16x128xf32>
    %c0_9 = arith.constant 0 : index
    %c2 = arith.constant 2 : index
    %c0_10 = arith.constant 0 : index
    %c0_11 = arith.constant 0 : index
    %8 = vector.load %arg1[%c0_9, %c2, %c0_10, %c0_11] : memref<1x3x16x128xf32, #tpu.memory_space<vmem>>, vector<1x1x16x128xf32>
    %9 = vector.shape_cast %8 : vector<1x1x16x128xf32> to vector<16x128xf32>
    %c0_12 = arith.constant 0 : index
    %c0_13 = arith.constant 0 : index
    %c0_14 = arith.constant 0 : index
    %c0_15 = arith.constant 0 : index
    %10 = vector.load %arg2[%c0_12, %c0_13, %c0_14, %c0_15] : memref<1x2x16x128xf32, #tpu.memory_space<vmem>>, vector<1x1x16x128xf32>
    %11 = vector.shape_cast %10 : vector<1x1x16x128xf32> to vector<16x128xf32>
    %c0_16 = arith.constant 0 : index
    %c1_17 = arith.constant 1 : index
    %c0_18 = arith.constant 0 : index
    %c0_19 = arith.constant 0 : index
    %12 = vector.load %arg2[%c0_16, %c1_17, %c0_18, %c0_19] : memref<1x2x16x128xf32, #tpu.memory_space<vmem>>, vector<1x1x16x128xf32>
    %13 = vector.shape_cast %12 : vector<1x1x16x128xf32> to vector<16x128xf32>
    %14 = arith.subf %5, %11 : vector<16x128xf32>
    %15 = arith.subf %7, %13 : vector<16x128xf32>
    %16 = vector.broadcast %0 : f32 to vector<16x128xf32>
    %17 = arith.mulf %5, %16 : vector<16x128xf32>
    %18 = vector.broadcast %0 : f32 to vector<16x128xf32>
    %19 = arith.mulf %7, %18 : vector<16x128xf32>
    %c15_i32 = arith.constant 15 : i32
    %20 = tpu.dynamic_rotate %17 by %c15_i32 dim 0 : vector<16x128xf32>, i32 -> vector<16x128xf32>
    %c1_i32 = arith.constant 1 : i32
    %21 = tpu.dynamic_rotate %17 by %c1_i32 dim 0 : vector<16x128xf32>, i32 -> vector<16x128xf32>
    %c127_i32 = arith.constant 127 : i32
    %22 = tpu.dynamic_rotate %17 by %c127_i32 dim 1 : vector<16x128xf32>, i32 -> vector<16x128xf32>
    %c1_i32_20 = arith.constant 1 : i32
    %23 = tpu.dynamic_rotate %17 by %c1_i32_20 dim 1 : vector<16x128xf32>, i32 -> vector<16x128xf32>
    %c15_i32_21 = arith.constant 15 : i32
    %24 = tpu.dynamic_rotate %19 by %c15_i32_21 dim 0 : vector<16x128xf32>, i32 -> vector<16x128xf32>
    %c1_i32_22 = arith.constant 1 : i32
    %25 = tpu.dynamic_rotate %19 by %c1_i32_22 dim 0 : vector<16x128xf32>, i32 -> vector<16x128xf32>
    %c127_i32_23 = arith.constant 127 : i32
    %26 = tpu.dynamic_rotate %19 by %c127_i32_23 dim 1 : vector<16x128xf32>, i32 -> vector<16x128xf32>
    %c1_i32_24 = arith.constant 1 : i32
    %27 = tpu.dynamic_rotate %19 by %c1_i32_24 dim 1 : vector<16x128xf32>, i32 -> vector<16x128xf32>
    %c15_i32_25 = arith.constant 15 : i32
    %28 = tpu.dynamic_rotate %9 by %c15_i32_25 dim 0 : vector<16x128xf32>, i32 -> vector<16x128xf32>
    %c1_i32_26 = arith.constant 1 : i32
    %29 = tpu.dynamic_rotate %9 by %c1_i32_26 dim 0 : vector<16x128xf32>, i32 -> vector<16x128xf32>
    %c1_i32_27 = arith.constant 1 : i32
    %30 = tpu.dynamic_rotate %9 by %c1_i32_27 dim 1 : vector<16x128xf32>, i32 -> vector<16x128xf32>
    %31 = arith.subf %20, %21 : vector<16x128xf32>
    %cst_28 = arith.constant 1.275000e+02 : f32
    %32 = vector.broadcast %cst_28 : f32 to vector<16x128xf32>
    %33 = arith.mulf %31, %32 : vector<16x128xf32>
    %34 = arith.subf %22, %23 : vector<16x128xf32>
    %cst_29 = arith.constant 1.275000e+02 : f32
    %35 = vector.broadcast %cst_29 : f32 to vector<16x128xf32>
    %36 = arith.mulf %34, %35 : vector<16x128xf32>
    %37 = arith.subf %24, %25 : vector<16x128xf32>
    %cst_30 = arith.constant 1.275000e+02 : f32
    %38 = vector.broadcast %cst_30 : f32 to vector<16x128xf32>
    %39 = arith.mulf %37, %38 : vector<16x128xf32>
    %40 = arith.subf %26, %27 : vector<16x128xf32>
    %cst_31 = arith.constant 1.275000e+02 : f32
    %41 = vector.broadcast %cst_31 : f32 to vector<16x128xf32>
    %42 = arith.mulf %40, %41 : vector<16x128xf32>
    %43 = arith.subf %28, %29 : vector<16x128xf32>
    %44 = vector.broadcast %2 : f32 to vector<16x128xf32>
    %45 = arith.mulf %43, %44 : vector<16x128xf32>
    %46 = arith.subf %28, %30 : vector<16x128xf32>
    %47 = vector.broadcast %3 : f32 to vector<16x128xf32>
    %48 = arith.mulf %46, %47 : vector<16x128xf32>
    %cst_32 = arith.constant 2.000000e+00 : f32
    %49 = vector.broadcast %cst_32 : f32 to vector<16x128xf32>
    %50 = arith.mulf %49, %17 : vector<16x128xf32>
    %51 = arith.subf %20, %50 : vector<16x128xf32>
    %52 = arith.addf %51, %21 : vector<16x128xf32>
    %cst_33 = arith.constant 2.550000e-03 : f32
    %53 = vector.broadcast %cst_33 : f32 to vector<16x128xf32>
    %54 = arith.mulf %52, %53 : vector<16x128xf32>
    %cst_34 = arith.constant 2.000000e+00 : f32
    %55 = vector.broadcast %cst_34 : f32 to vector<16x128xf32>
    %56 = arith.mulf %55, %19 : vector<16x128xf32>
    %57 = arith.subf %22, %56 : vector<16x128xf32>
    %58 = arith.addf %57, %23 : vector<16x128xf32>
    %cst_35 = arith.constant 2.550000e-03 : f32
    %59 = vector.broadcast %cst_35 : f32 to vector<16x128xf32>
    %60 = arith.mulf %58, %59 : vector<16x128xf32>
    %61 = arith.addf %54, %60 : vector<16x128xf32>
    %62 = arith.subf %25, %19 : vector<16x128xf32>
    %cst_36 = arith.constant 5.100000e-03 : f32
    %63 = vector.broadcast %cst_36 : f32 to vector<16x128xf32>
    %64 = arith.mulf %62, %63 : vector<16x128xf32>
    %65 = arith.subf %27, %19 : vector<16x128xf32>
    %cst_37 = arith.constant 5.100000e-03 : f32
    %66 = vector.broadcast %cst_37 : f32 to vector<16x128xf32>
    %67 = arith.mulf %65, %66 : vector<16x128xf32>
    %68 = arith.addf %64, %67 : vector<16x128xf32>
    %69 = arith.addf %33, %42 : vector<16x128xf32>
    %70 = math.absf %69 : vector<16x128xf32>
    %71 = vector.broadcast %1 : f32 to vector<16x128xf32>
    %72 = arith.mulf %71, %14 : vector<16x128xf32>
    %73 = arith.mulf %17, %33 : vector<16x128xf32>
    %74 = arith.addf %72, %73 : vector<16x128xf32>
    %75 = arith.mulf %19, %36 : vector<16x128xf32>
    %76 = arith.addf %74, %75 : vector<16x128xf32>
    %77 = arith.addf %76, %45 : vector<16x128xf32>
    %78 = arith.subf %77, %61 : vector<16x128xf32>
    %79 = math.absf %78 : vector<16x128xf32>
    %80 = vector.broadcast %1 : f32 to vector<16x128xf32>
    %81 = arith.mulf %80, %15 : vector<16x128xf32>
    %82 = arith.mulf %17, %39 : vector<16x128xf32>
    %83 = arith.addf %81, %82 : vector<16x128xf32>
    %84 = arith.mulf %19, %42 : vector<16x128xf32>
    %85 = arith.addf %83, %84 : vector<16x128xf32>
    %86 = arith.addf %85, %48 : vector<16x128xf32>
    %87 = arith.subf %86, %68 : vector<16x128xf32>
    %88 = math.absf %87 : vector<16x128xf32>
    %89 = arith.addf %70, %79 : vector<16x128xf32>
    %90 = arith.addf %89, %88 : vector<16x128xf32>
    %c0_38 = arith.constant 0 : index
    %c0_39 = arith.constant 0 : index
    %91 = vector.load %arg3[%c0_38, %c0_39] : memref<16x128xf32, #tpu.memory_space<vmem>>, vector<16x128xf32>
    %92 = arith.mulf %90, %91 : vector<16x128xf32>
    %93 = vector.extract_strided_slice %92 {offsets = [0, 0], sizes = [8, 128], strides = [1, 1]} : vector<16x128xf32> to vector<8x128xf32>
    %94 = vector.extract_strided_slice %92 {offsets = [8, 0], sizes = [8, 128], strides = [1, 1]} : vector<16x128xf32> to vector<8x128xf32>
    %95 = arith.addf %93, %94 : vector<8x128xf32>
    %c0_40 = arith.constant 0 : index
    %c0_41 = arith.constant 0 : index
    %c0_42 = arith.constant 0 : index
    %96 = vector.load %arg5[%c0_40, %c0_41, %c0_42] : memref<1x8x128xf32, #tpu.memory_space<vmem>>, vector<1x8x128xf32>
    %97 = vector.shape_cast %96 : vector<1x8x128xf32> to vector<8x128xf32>
    %98 = vector.shape_cast %95 : vector<8x128xf32> to vector<1x8x128xf32>
    tpu.vector_store %arg5[%c0_40, %c0_41, %c0_42], %98 {strides = array<i32>} : memref<1x8x128xf32, #tpu.memory_space<vmem>>, vector<1x8x128xf32>,
    return
  }
  func.func @transform_0(%arg0: i32) -> (i32, i32, i32, i32) {
    %c1_i32 = arith.constant 1 : i32
    %0 = arith.addi %arg0, %c1_i32 : i32
    %c0_i32 = arith.constant 0 : i32
    %c0_i32_0 = arith.constant 0 : i32
    %c0_i32_1 = arith.constant 0 : i32
    %c0_i32_2 = arith.constant 0 : i32
    return %0, %c0_i32, %c0_i32_0, %c0_i32_1 : i32, i32, i32, i32
  }
  func.func @transform_1(%arg0: i32) -> (i32, i32, i32, i32) {
    %c0_i32 = arith.constant 0 : i32
    %c0_i32_0 = arith.constant 0 : i32
    %c0_i32_1 = arith.constant 0 : i32
    %c0_i32_2 = arith.constant 0 : i32
    return %arg0, %c0_i32, %c0_i32_0, %c0_i32_1 : i32, i32, i32, i32
  }
  func.func @transform_2(%arg0: i32) -> (i32, i32) {
    %c0_i32 = arith.constant 0 : i32
    %c0_i32_0 = arith.constant 0 : i32
    %c0_i32_1 = arith.constant 0 : i32
    return %c0_i32, %c0_i32_0 : i32, i32
  }
  func.func @transform_3(%arg0: i32) -> i32 {
    %c0_i32 = arith.constant 0 : i32
    %c0_i32_0 = arith.constant 0 : i32
    return %c0_i32 : i32
  }
  func.func @transform_4(%arg0: i32) -> (i32, i32, i32) {
    %c0_i32 = arith.constant 0 : i32
    %c0_i32_0 = arith.constant 0 : i32
    %c0_i32_1 = arith.constant 0 : i32
    return %arg0, %c0_i32, %c0_i32_0 : i32, i32, i32
  }
}

</mosaic_0001>

<llo_original>
// kernel: tpu_custom_call.1
$region0: #{tpu_custom_call.1}
  #allocation0 [shape = 'u32[]', space=smem, size = 0x4, offset = 0x4, fixed_abs, tag = 'smem constant byte address 0x4 - core index']
  #allocation1 [shape = 'u32[144,128]{1,0:T(1,128)}', space=vmem, size = 0x12000, scoped, tag = 'internal scratch']
  #allocation2 [shape = 'f32[1]{0:T(128)S(6)}', space=smem, size = 0x200, scoped, tag = 'scoped memory for tpu_custom_call.1']
  %s0 = inlined_call_operand.hbm [shape: f32[4,3,16,128], index: 0, kind: input, shape index: {}]
  %s1 = inlined_call_operand.hbm [shape: f32[4,3,16,128], index: 1, kind: input, shape index: {}]
  %s2 = inlined_call_operand.hbm [shape: f32[16,128], index: 2, kind: input, shape index: {}]
  %s3 = inlined_call_operand.<no memory space> [shape: f32[1], index: 3, kind: input, shape index: {}]
  %s4 = inlined_call_operand.hbm [shape: f32[3,8,128], index: 4, kind: output, shape index: {}]
  %s5 = sld [smem:[#allocation0]]
  $region61: #{tpu_custom_call.1} parent=0
    _
  %s7 = ssub.s32 1, %s5
  %s8 = scalar_select 0, %s7, %s5
  %9 = sst [smem:[#allocation2]] %s3
  $region1: #{tpu_custom_call.1} parent=0
    #allocation3 [shape = 'u8[49152]{0}', space=vmem, size = 0xc000, scoped, tag = 'input window, operand 0']
    #allocation4 [shape = 's32[2]{0}', space=sflag, size = 0x8, scoped, tag = 'scoped memory for tpu_custom_call.1']
    #allocation5 [shape = 's32[2]{0}', space=sflag, size = 0x8, scoped, tag = 'scoped memory for tpu_custom_call.1']
    #allocation6 [shape = 'u8[32768]{0}', space=vmem, size = 0x8000, scoped, tag = 'input window, operand 1']
    #allocation7 [shape = 's32[2]{0}', space=sflag, size = 0x8, scoped, tag = 'scoped memory for tpu_custom_call.1']
    #allocation8 [shape = 'u8[8192]{0}', space=vmem, size = 0x2000, scoped, tag = 'input window, operand 2, single buffered']
    #allocation9 [shape = 'u8[8192]{0}', space=vmem, size = 0x2000, scoped, tag = 'output window, operand 0']
    %10 = vsyncpa [#allocation4], 0
    %s11 = scalar_lea.sflag [#allocation4], 1
    %12 = vsyncpa %s11, 0
    %13 = vsyncpa [#allocation7], 0
    %s14 = scalar_lea.sflag [#allocation7], 1
    %15 = vsyncpa %s14, 0
    %16 = vsyncpa [#allocation5], 0
    %s17 = scalar_lea.sflag [#allocation5], 1
    %18 = vsyncpa %s17, 0
    loop: start=0, step=1, limit=5
    $region2: #{tpu_custom_call.1} parent=1 // loop_pre_header
      _
    $region3: #{tpu_custom_call.1} parent=1 // loop_header
      %s20 = sphi 0, %s24
      %p21 = scmp.ge.s32.totalorder %s20, 5
      %s32 = sphi 0, %s34
      %s35 = sphi 0, %s32
      %s36 = sphi 0, %s35
      %s52 = sphi 0, %s36
      %s58 = sphi 0, %s60
      %s61 = sphi 0, %s58
      %s62 = sphi 0, %s61
      %s78 = sphi 0, %s62
      %s82 = sphi 0, %s82
      %s84 = sphi 0, %s82
      %s85 = sphi 0, %s84
      %s99 = sphi 0, %s85
      %s103 = sphi 0, %s103
      %s105 = sphi 0, %s103
      %s106 = sphi 0, %s105
      %s120 = sphi 0, %s106
      %s126 = sphi 0, %s128
      %s129 = sphi 0, %s126
      %s130 = sphi 0, %s129
      %s146 = sphi 0, %s130
    $region4: #{tpu_custom_call.1} parent=1 // loop_header_branch
      %23 = sbr.rel (%p21) target = $region8
    $region5: #{tpu_custom_call.1} parent=1 // loop_body
      %s25 = ssub.s32 %s20, 1
      %s26 = ssub.s32 %s20, 2
      %s27 = sadd.s32 %s20, 1
      %s28 = sadd.s32 %s20, 1
      %s29 = sadd.s32 %s27, 1
      %s30 = ssub.s32 %s28, %s29
      %p31 = scmp.eq.s32.totalorder %s30, 0
      %s33 = sadd.s32 %s32, 1
      %s34 = scalar_select %p31, %s32, %s33
      %p37 = pneg %p31
      %p38 = scmp.eq.s32.totalorder %s20, 2
      %p39 = por %p37, %p38
      %p40 = scmp.ne.s32.totalorder %s32, %s35
      %p41 = scmp.eq.s32.totalorder %s20, 0
      %p42 = por %p40, %p41
      %p43 = scmp.ne.s32.totalorder %s32, %s35
      %p44 = scmp.eq.s32.totalorder %s25, 2
      %p45 = por %p43, %p44
      %p46 = scmp.ne.s32.totalorder %s35, %s36
      %p47 = scmp.eq.s32.totalorder %s25, 0
      %p48 = por %p46, %p47
      %p49 = scmp.ne.s32.totalorder %s35, %s36
      %p50 = scmp.eq.s32.totalorder %s26, 2
      %p51 = por %p49, %p50
      %p53 = scmp.ne.s32.totalorder %s36, %s52
      %p54 = scmp.eq.s32.totalorder %s26, 0
      %p55 = por %p53, %p54
      %s56 = ssub.s32 %s20, %s27
      %p57 = scmp.eq.s32.totalorder %s56, 0
      %s59 = sadd.s32 %s58, 1
      %s60 = scalar_select %p57, %s58, %s59
      %p63 = pneg %p57
      %p64 = scmp.eq.s32.totalorder %s20, 2
      %p65 = por %p63, %p64
      %p66 = scmp.ne.s32.totalorder %s58, %s61
      %p67 = scmp.eq.s32.totalorder %s20, 0
      %p68 = por %p66, %p67
      %p69 = scmp.ne.s32.totalorder %s58, %s61
      %p70 = scmp.eq.s32.totalorder %s25, 2
      %p71 = por %p69, %p70
      %p72 = scmp.ne.s32.totalorder %s61, %s62
      %p73 = scmp.eq.s32.totalorder %s25, 0
      %p74 = por %p72, %p73
      %p75 = scmp.ne.s32.totalorder %s61, %s62
      %p76 = scmp.eq.s32.totalorder %s26, 2
      %p77 = por %p75, %p76
      %p79 = scmp.ne.s32.totalorder %s62, %s78
      %p80 = scmp.eq.s32.totalorder %s26, 0
      %p81 = por %p79, %p80
      %s83 = sadd.s32 %s82, 1
      %p86 = scmp.eq.s32.totalorder %s20, 2
      %p87 = scmp.ne.s32.totalorder %s82, %s84
      %p88 = scmp.eq.s32.totalorder %s20, 0
      %p89 = por %p87, %p88
      %p90 = scmp.ne.s32.totalorder %s82, %s84
      %p91 = scmp.eq.s32.totalorder %s25, 2
      %p92 = por %p90, %p91
      %p93 = scmp.ne.s32.totalorder %s84, %s85
      %p94 = scmp.eq.s32.totalorder %s25, 0
      %p95 = por %p93, %p94
      %p96 = scmp.ne.s32.totalorder %s84, %s85
      %p97 = scmp.eq.s32.totalorder %s26, 2
      %p98 = por %p96, %p97
      %p100 = scmp.ne.s32.totalorder %s85, %s99
      %p101 = scmp.eq.s32.totalorder %s26, 0
      %p102 = por %p100, %p101
      %s104 = sadd.s32 %s103, 1
      %p107 = scmp.eq.s32.totalorder %s20, 2
      %p108 = scmp.ne.s32.totalorder %s103, %s105
      %p109 = scmp.eq.s32.totalorder %s20, 0
      %p110 = por %p108, %p109
      %p111 = scmp.ne.s32.totalorder %s103, %s105
      %p112 = scmp.eq.s32.totalorder %s25, 2
      %p113 = por %p111, %p112
      %p114 = scmp.ne.s32.totalorder %s105, %s106
      %p115 = scmp.eq.s32.totalorder %s25, 0
      %p116 = por %p114, %p115
      %p117 = scmp.ne.s32.totalorder %s105, %s106
      %p118 = scmp.eq.s32.totalorder %s26, 2
      %p119 = por %p117, %p118
      %p121 = scmp.ne.s32.totalorder %s106, %s120
      %p122 = scmp.eq.s32.totalorder %s26, 0
      %p123 = por %p121, %p122
      %s124 = ssub.s32 %s20, %s27
      %p125 = scmp.eq.s32.totalorder %s124, 0
      %s127 = sadd.s32 %s126, 1
      %s128 = scalar_select %p125, %s126, %s127
      %p131 = pneg %p125
      %p132 = scmp.eq.s32.totalorder %s20, 2
      %p133 = por %p131, %p132
      %p134 = scmp.ne.s32.totalorder %s126, %s129
      %p135 = scmp.eq.s32.totalorder %s20, 0
      %p136 = por %p134, %p135
      %p137 = scmp.ne.s32.totalorder %s126, %s129
      %p138 = scmp.eq.s32.totalorder %s25, 2
      %p139 = por %p137, %p138
      %p140 = scmp.ne.s32.totalorder %s129, %s130
      %p141 = scmp.eq.s32.totalorder %s25, 0
      %p142 = por %p140, %p141
      %p143 = scmp.ne.s32.totalorder %s129, %s130
      %p144 = scmp.eq.s32.totalorder %s26, 2
      %p145 = por %p143, %p144
      %p147 = scmp.ne.s32.totalorder %s130, %s146
      %p148 = scmp.eq.s32.totalorder %s26, 0
      %p149 = por %p147, %p148
      %p150 = scmp.le.s32.totalorder 1, %s20
      %p151 = scmp.lt.s32.totalorder %s20, 4
      %p152 = pnand %p150, %p151
      %p153 = pneg %p152
      // Predicated region
      $region9: #{tpu_custom_call.1} parent=5 // pred_check
        _
      $region10: #{tpu_custom_call.1} parent=5 // pred_check_branch
        %155 = sbr.rel (%p152) target = $region12
      $region11: #{tpu_custom_call.1} parent=5 // pred_region
        %s156 = ssub.s32 %s20, 1
        // Predicated region
        $region13: #{tpu_custom_call.1} parent=11 // pred_check
          %p157 = pneg %p95
        $region14: #{tpu_custom_call.1} parent=11 // pred_check_branch
          %159 = sbr.rel (%p157) target = $region16
        $region15: #{tpu_custom_call.1} parent=11 // pred_region
          %s161 = ssub.s32 256, 256
          %162 = vsyncadd [#allocation7], %s161
          %s163 = sshll.u32 [#allocation8], 4
          %s164 = int_to_ptr.vmem [resolvable:$true] %s163
          %169 = dma.hbm_to_vmem [thread:$0]  %s2, 256, %s164, [#allocation7], 128, 128, 8
        $region16: #{tpu_custom_call.1} parent=11 // pred_fallthru
          _
        // Predicated region
        $region17: #{tpu_custom_call.1} parent=11 // pred_check
          %p170 = pneg %p116
        $region18: #{tpu_custom_call.1} parent=11 // pred_check_branch
          %172 = sbr.rel (%p170) target = $region20
        $region19: #{tpu_custom_call.1} parent=11 // pred_region
          _
        $region20: #{tpu_custom_call.1} parent=11 // pred_fallthru
          _
      $region12: #{tpu_custom_call.1} parent=5 // pred_fallthru
        _
      %p173 = scmp.lt.s32.totalorder %s20, 3
      // Predicated region
      $region21: #{tpu_custom_call.1} parent=5 // pred_check
        %p174 = pneg %p173
      $region22: #{tpu_custom_call.1} parent=5 // pred_check_branch
        %176 = sbr.rel (%p174) target = $region24
      $region23: #{tpu_custom_call.1} parent=5 // pred_region
        // Predicated region
        $region25: #{tpu_custom_call.1} parent=23 // pred_check
          %p177 = pneg %p42
        $region26: #{tpu_custom_call.1} parent=23 // pred_check_branch
          %179 = sbr.rel (%p177) target = $region28
        $region27: #{tpu_custom_call.1} parent=23 // pred_region
          %s180 = sand.u32 %s32, 1
          %s181 = scalar_lea.sflag [#allocation4], %s180
          %s182 = sand.u32 %s32, 1
          %s183 = smul.addr %s182, 48
          %s184 = scalar_lea.vmem [#allocation3], %s183
          %s185 = sadd.s32 %s20, 1
          %s187 = ssub.s32 768, 768
          %188 = vsyncadd %s181, %s187
          %s189 = smul.addr %s185, 6
          %s190 = smul.addr %s189, 128
          %s191 = scalar_lea.hbm %s0, %s190
          %s192 = sshll.u32 %s184, 4
          %s193 = int_to_ptr.vmem [resolvable:$true] %s192
          %198 = dma.hbm_to_vmem [thread:$0]  %s191, 768, %s193, %s181, 128, 128, 8
        $region28: #{tpu_custom_call.1} parent=23 // pred_fallthru
          _
        // Predicated region
        $region29: #{tpu_custom_call.1} parent=23 // pred_check
          %p199 = pneg %p68
        $region30: #{tpu_custom_call.1} parent=23 // pred_check_branch
          %201 = sbr.rel (%p199) target = $region32
        $region31: #{tpu_custom_call.1} parent=23 // pred_region
          %s202 = sand.u32 %s20, 1
          %s203 = scalar_lea.sflag [#allocation7], %s202
          %s204 = sand.u32 %s58, 1
          %s205 = smul.addr %s204, 32
          %s206 = scalar_lea.vmem [#allocation6], %s205
          %s208 = ssub.s32 512, 512
          %209 = vsyncadd %s203, %s208
          %s210 = smul.addr %s20, 6
          %s211 = smul.addr %s210, 128
          %s212 = scalar_lea.hbm %s1, %s211
          %s213 = sshll.u32 %s206, 4
          %s214 = int_to_ptr.vmem [resolvable:$true] %s213
          %219 = dma.hbm_to_vmem [thread:$0]  %s212, 512, %s214, %s203, 128, 128, 8
        $region32: #{tpu_custom_call.1} parent=23 // pred_fallthru
          _
      $region24: #{tpu_custom_call.1} parent=5 // pred_fallthru
        _
      %p220 = scmp.le.s32.totalorder 1, %s20
      %p221 = scmp.lt.s32.totalorder %s20, 4
      %p222 = pnand %p220, %p221
      %p223 = pneg %p222
      // Predicated region
      $region33: #{tpu_custom_call.1} parent=5 // pred_check
        _
      $region34: #{tpu_custom_call.1} parent=5 // pred_check_branch
        %225 = sbr.rel (%p222) target = $region36
      $region35: #{tpu_custom_call.1} parent=5 // pred_region
        %s226 = ssub.s32 %s20, 1
        %s227 = sand.u32 %s35, 1
        %s228 = scalar_lea.sflag [#allocation4], %s227
        %s229 = sand.u32 %s35, 1
        %s230 = smul.addr %s229, 48
        %s231 = scalar_lea.vmem [#allocation3], %s230
        // Predicated region
        $region37: #{tpu_custom_call.1} parent=35 // pred_check
          %p232 = pneg %p48
        $region38: #{tpu_custom_call.1} parent=35 // pred_check_branch
          %234 = sbr.rel (%p232) target = $region40
        $region39: #{tpu_custom_call.1} parent=35 // pred_region
          %235 = dma.done %s228, 768
        $region40: #{tpu_custom_call.1} parent=35 // pred_fallthru
          _
        %s236 = sand.u32 %s25, 1
        %s237 = scalar_lea.sflag [#allocation7], %s236
        %s238 = sand.u32 %s61, 1
        %s239 = smul.addr %s238, 32
        %s240 = scalar_lea.vmem [#allocation6], %s239
        // Predicated region
        $region41: #{tpu_custom_call.1} parent=35 // pred_check
          %p241 = pneg %p74
        $region42: #{tpu_custom_call.1} parent=35 // pred_check_branch
          %243 = sbr.rel (%p241) target = $region44
        $region43: #{tpu_custom_call.1} parent=35 // pred_region
          %244 = dma.done %s237, 512
        $region44: #{tpu_custom_call.1} parent=35 // pred_fallthru
          _
        // Predicated region
        $region45: #{tpu_custom_call.1} parent=35 // pred_check
          %p245 = pneg %p95
        $region46: #{tpu_custom_call.1} parent=35 // pred_check_branch
          %247 = sbr.rel (%p245) target = $region48
        $region47: #{tpu_custom_call.1} parent=35 // pred_region
          %248 = dma.done [#allocation7], 256
        $region48: #{tpu_custom_call.1} parent=35 // pred_fallthru
          _
        %s249 = sand.u32 %s35, 1
        %s250 = scalar_lea.sflag [#allocation4], %s249
        %s251 = sand.u32 %s35, 1
        %s252 = smul.addr %s251, 48
        %s253 = scalar_lea.vmem [#allocation3], %s252
        %p254 = pneg %p48
        %p255 = pneg %p45
        %s256 = sand.u32 %s25, 1
        %s257 = scalar_lea.sflag [#allocation7], %s256
        %s258 = sand.u32 %s61, 1
        %s259 = smul.addr %s258, 32
        %s260 = scalar_lea.vmem [#allocation6], %s259
        %p261 = pneg %p74
        %p262 = pneg %p71
        %p263 = pneg %p95
        %p264 = pneg %p92
        %p265 = pneg %p116
        %p266 = pneg %p113
        %p267 = pneg %p142
        %p268 = pneg %p139
        %s269 = sand.u32 %s129, 1
        %s270 = scalar_lea.sflag [#allocation5], %s269
        %s271 = sand.u32 %s129, 1
        %s272 = smul.addr %s271, 8
        %s273 = scalar_lea.vmem [#allocation9], %s272
        %s274 = sadd.s32 %s25, 1
        %s275 = sld [smem:[#allocation2]]
        %s276 = smul.f32 %s275, 32.0
        %s277 = smul.f32 %s275, 127.5
        %v278 = vld [vmem:[%s231] sm:$0xff]
        %v279 = vld [vmem:[%s231 + $0x8] sm:$0xff]
        %s280 = scalar_lea.vmem %s231, 16 [#allocation3]
        %v281 = vld [vmem:[%s280] sm:$0xff]
        %v282 = vld [vmem:[%s280 + $0x8] sm:$0xff]
        %s283 = scalar_lea.vmem %s231, 32 [#allocation3]
        %v284 = vld [vmem:[%s283] sm:$0xff]
        %v285 = vld [vmem:[%s283 + $0x8] sm:$0xff]
        %v286 = vld [vmem:[%s240] sm:$0xff]
        %v287 = vld [vmem:[%s240 + $0x8] sm:$0xff]
        %s288 = scalar_lea.vmem %s240, 16 [#allocation6]
        %v289 = vld [vmem:[%s288] sm:$0xff]
        %v290 = vld [vmem:[%s288 + $0x8] sm:$0xff]
        %v291 = vsub.f32 %v278, %v286
        %v292 = vsub.f32 %v279, %v287
        %v293 = vsub.f32 %v281, %v289
        %v294 = vsub.f32 %v282, %v290
        %v295 = vstv %s275
        %v296 = vmul.f32 %v278, %v295
        %v297 = vmul.f32 %v279, %v295
        %v298 = vmul.f32 %v281, %v295
        %v299 = vmul.f32 %v282, %v295
        %v300 = vrot.slane %v296, 1
        %v301 = vrot.slane %v297, 1
        %v302 = vlaneseq
        %v303 = vshrl.u32 %v302, 7
        %vm304 = vcmp.lt.s32.totalorder %v303, 7
        %v305 = vsel %vm304, %v300, %v301
        %v306 = vsel %vm304, %v301, %v300
        %v307 = vrot.slane %v296, 7
        %v308 = vrot.slane %v297, 7
        %vm309 = vcmp.lt.s32.totalorder %v303, 1
        %v310 = vsel %vm309, %v307, %v308
        %v311 = vsel %vm309, %v308, %v307
        %312 = vrot.lane.b32.xlu0 %v296, 127
        %v313 = vpop.permute.xlu0 %312
        %314 = vrot.lane.b32.xlu0 %v297, 127
        %v315 = vpop.permute.xlu0 %314
        %316 = vrot.lane.b32.xlu0 %v296, 1
        %v317 = vpop.permute.xlu0 %316
        %318 = vrot.lane.b32.xlu0 %v297, 1
        %v319 = vpop.permute.xlu0 %318
        %v320 = vrot.slane %v298, 1
        %v321 = vrot.slane %v299, 1
        %v322 = vsel %vm304, %v320, %v321
        %v323 = vsel %vm304, %v321, %v320
        %v324 = vrot.slane %v298, 7
        %v325 = vrot.slane %v299, 7
        %v326 = vsel %vm309, %v324, %v325
        %v327 = vsel %vm309, %v325, %v324
        %328 = vrot.lane.b32.xlu0 %v298, 127
        %v329 = vpop.permute.xlu0 %328
        %330 = vrot.lane.b32.xlu0 %v299, 127
        %v331 = vpop.permute.xlu0 %330
        %332 = vrot.lane.b32.xlu0 %v298, 1
        %v333 = vpop.permute.xlu0 %332
        %334 = vrot.lane.b32.xlu0 %v299, 1
        %v335 = vpop.permute.xlu0 %334
        %v336 = vrot.slane %v284, 1
        %v337 = vrot.slane %v285, 1
        %v338 = vsel %vm304, %v336, %v337
        %v339 = vsel %vm304, %v337, %v336
        %v340 = vrot.slane %v284, 7
        %v341 = vrot.slane %v285, 7
        %v342 = vsel %vm309, %v340, %v341
        %v343 = vsel %vm309, %v341, %v340
        %344 = vrot.lane.b32.xlu0 %v284, 1
        %v345 = vpop.permute.xlu0 %344
        %346 = vrot.lane.b32.xlu0 %v285, 1
        %v347 = vpop.permute.xlu0 %346
        %v348 = vsub.f32 %v305, %v311
        %v349 = vsub.f32 %v306, %v310
        %v350 = vmul.f32 %v348, 127.5
        %v351 = vmul.f32 %v349, 127.5
        %v352 = vsub.f32 %v313, %v317
        %v353 = vsub.f32 %v315, %v319
        %v354 = vmul.f32 %v352, 127.5
        %v355 = vmul.f32 %v353, 127.5
        %v356 = vsub.f32 %v322, %v327
        %v357 = vsub.f32 %v323, %v326
        %v358 = vmul.f32 %v356, 127.5
        %v359 = vmul.f32 %v357, 127.5
        %v360 = vsub.f32 %v329, %v333
        %v361 = vsub.f32 %v331, %v335
        %v362 = vmul.f32 %v360, 127.5
        %v363 = vmul.f32 %v361, 127.5
        %v364 = vsub.f32 %v338, %v343
        %v365 = vsub.f32 %v339, %v342
        %v366 = vstv %s277
        %v367 = vmul.f32 %v364, %v366
        %v368 = vmul.f32 %v365, %v366
        %v369 = vsub.f32 %v338, %v345
        %v370 = vsub.f32 %v339, %v347
        %v371 = vmul.f32 %v369, %v366
        %v372 = vmul.f32 %v370, %v366
        %v373 = vmul.f32 %v296, 2.0
        %v374 = vmul.f32 %v297, 2.0
        %v375 = vsub.f32 %v305, %v373
        %v376 = vsub.f32 %v306, %v374
        %v377 = vadd.f32 %v375, %v311
        %v378 = vadd.f32 %v376, %v310
        %v379 = vmul.f32 %v377, 0.00255
        %v380 = vmul.f32 %v378, 0.00255
        %v381 = vmul.f32 %v298, 2.0
        %v382 = vmul.f32 %v299, 2.0
        %v383 = vsub.f32 %v313, %v381
        %v384 = vsub.f32 %v315, %v382
        %v385 = vadd.f32 %v383, %v317
        %v386 = vadd.f32 %v384, %v319
        %v387 = vmul.f32 %v385, 0.00255
        %v388 = vmul.f32 %v386, 0.00255
        %v389 = vadd.f32 %v379, %v387
        %v390 = vadd.f32 %v380, %v388
        %v391 = vsub.f32 %v327, %v298
        %v392 = vsub.f32 %v326, %v299
        %v393 = vmul.f32 %v391, 0.0051
        %v394 = vmul.f32 %v392, 0.0051
        %v395 = vsub.f32 %v333, %v298
        %v396 = vsub.f32 %v335, %v299
        %v397 = vmul.f32 %v395, 0.0051
        %v398 = vmul.f32 %v396, 0.0051
        %v399 = vadd.f32 %v393, %v397
        %v400 = vadd.f32 %v394, %v398
        %v401 = vadd.f32 %v350, %v362
        %v402 = vadd.f32 %v351, %v363
        %v403 = vand.u32 2147483647, %v401
        %v404 = vand.u32 2147483647, %v402
        %v405 = vstv %s276
        %v406 = vmul.f32 %v405, %v291
        %v407 = vmul.f32 %v405, %v292
        %v408 = vmul.f32 %v296, %v350
        %v409 = vmul.f32 %v297, %v351
        %v410 = vadd.f32 %v406, %v408
        %v411 = vadd.f32 %v407, %v409
        %v412 = vmul.f32 %v298, %v354
        %v413 = vmul.f32 %v299, %v355
        %v414 = vadd.f32 %v410, %v412
        %v415 = vadd.f32 %v411, %v413
        %v416 = vadd.f32 %v414, %v367
        %v417 = vadd.f32 %v415, %v368
        %v418 = vsub.f32 %v416, %v389
        %v419 = vsub.f32 %v417, %v390
        %v420 = vand.u32 2147483647, %v418
        %v421 = vand.u32 2147483647, %v419
        %v422 = vmul.f32 %v405, %v293
        %v423 = vmul.f32 %v405, %v294
        %v424 = vmul.f32 %v296, %v358
        %v425 = vmul.f32 %v297, %v359
        %v426 = vadd.f32 %v422, %v424
        %v427 = vadd.f32 %v423, %v425
        %v428 = vmul.f32 %v298, %v362
        %v429 = vmul.f32 %v299, %v363
        %v430 = vadd.f32 %v426, %v428
        %v431 = vadd.f32 %v427, %v429
        %v432 = vadd.f32 %v430, %v371
        %v433 = vadd.f32 %v431, %v372
        %v434 = vsub.f32 %v432, %v399
        %v435 = vsub.f32 %v433, %v400
        %v436 = vand.u32 2147483647, %v434
        %v437 = vand.u32 2147483647, %v435
        %v438 = vadd.f32 %v403, %v420
        %v439 = vadd.f32 %v404, %v421
        %v440 = vadd.f32 %v438, %v436
        %v441 = vadd.f32 %v439, %v437
        %v442 = vld [vmem:[#allocation8] sm:$0xff]
        %v443 = vld [vmem:[#allocation8 + $0x8] sm:$0xff]
        %v444 = vmul.f32 %v440, %v442
        %v445 = vmul.f32 %v441, %v443
        %v446 = vadd.f32 %v444, %v445
        %447 = vst [vmem:[%s273] sm:$0xff] %v446
        %s448 = sand.u32 %s129, 1
        %s449 = scalar_lea.sflag [#allocation5], %s448
        %s450 = sand.u32 %s129, 1
        %s451 = smul.addr %s450, 8
        %s452 = scalar_lea.vmem [#allocation9], %s451
        // Predicated region
        $region49: #{tpu_custom_call.1} parent=35 // pred_check
          %p453 = pneg %p139
        $region50: #{tpu_custom_call.1} parent=35 // pred_check_branch
          %455 = sbr.rel (%p453) target = $region52
        $region51: #{tpu_custom_call.1} parent=35 // pred_region
          %s457 = ssub.s32 128, 128
          %458 = vsyncadd %s449, %s457
          %s459 = smul.addr %s25, 128
          %s460 = scalar_lea.hbm %s4, %s459
          %s462 = sshll.u32 %s452, 4
          %s463 = int_to_ptr.vmem [resolvable:$true] %s462
          %465 = dma.vmem_to_hbm [thread:$0]  %s463, 128, %s460, %s449
        $region52: #{tpu_custom_call.1} parent=35 // pred_fallthru
          _
      $region36: #{tpu_custom_call.1} parent=5 // pred_fallthru
        _
      %p466 = scmp.le.s32.totalorder 2, %s20
      // Predicated region
      $region53: #{tpu_custom_call.1} parent=5 // pred_check
        %p467 = pneg %p466
      $region54: #{tpu_custom_call.1} parent=5 // pred_check_branch
        %469 = sbr.rel (%p467) target = $region56
      $region55: #{tpu_custom_call.1} parent=5 // pred_region
        %s470 = ssub.s32 %s20, 2
        // Predicated region
        $region57: #{tpu_custom_call.1} parent=55 // pred_check
          %p471 = pneg %p145
        $region58: #{tpu_custom_call.1} parent=55 // pred_check_branch
          %473 = sbr.rel (%p471) target = $region60
        $region59: #{tpu_custom_call.1} parent=55 // pred_region
          %s474 = sand.u32 %s130, 1
          %s475 = scalar_lea.sflag [#allocation5], %s474
          %s476 = sand.u32 %s130, 1
          %s477 = smul.addr %s476, 8
          %s478 = scalar_lea.vmem [#allocation9], %s477
          %479 = dma.done %s475, 128
        $region60: #{tpu_custom_call.1} parent=55 // pred_fallthru
          _
      $region56: #{tpu_custom_call.1} parent=5 // pred_fallthru
        _
    $region6: #{tpu_custom_call.1} parent=1 // loop_footer
      %s24 = sadd.s32 1, %s20
    $region7: #{tpu_custom_call.1} parent=1 // loop_footer_branch
      %19 = sbr.rel target = $region3
    $region8: #{tpu_custom_call.1} parent=1 // loop_exit
      _
    %480 = vsyncpa [#allocation4], 1
    %s481 = scalar_lea.sflag [#allocation4], 1
    %482 = vsyncpa %s481, 1
    %483 = vsyncpa [#allocation7], 1
    %s484 = scalar_lea.sflag [#allocation7], 1
    %485 = vsyncpa %s484, 1
    %486 = vsyncpa [#allocation5], 1
    %s487 = scalar_lea.sflag [#allocation5], 1
    %488 = vsyncpa %s487, 1

</llo_original>
